<compile_context>
chip_gen: v6e
topology: v6e:2x2x1
jax: 0.10.0
libtpu: 0.0.40
codegen_flags: <defaults>
</compile_context>

<pallas_src>
import jax
import jax.numpy as jnp
from jax.experimental import pallas as pl
from jax.experimental.pallas import tpu as pltpu


def _hbm_copy_kernel(x_hbm_ref, o_hbm_ref, sem):
    # Single HBM -> HBM DMA of the whole (already rank-expanded) buffer.
    # No VMEM staging, no TensorCore copy loop.
    cp = pltpu.make_async_copy(x_hbm_ref, o_hbm_ref, sem)
    cp.start()
    cp.wait()


def unsqueeze0(x: jax.Array) -> jax.Array:
    b, s1, s2 = x.shape

    # The actual unsqueeze(0): a zero-cost, metadata-only reshape.
    x4d = jnp.expand_dims(x, 0)  # [1, b, s1, s2]

    nbytes = x.size * x.dtype.itemsize

    # Fusion-site copy kept as a Pallas kernel (per spec); implemented as a
    # single direct HBM->HBM DMA.
    y = pl.pallas_call(
        _hbm_copy_kernel,
        out_shape=jax.ShapeDtypeStruct((1, b, s1, s2), x.dtype),
        in_specs=[pl.BlockSpec(memory_space=pl.ANY)],
        out_specs=pl.BlockSpec(memory_space=pl.ANY),
        scratch_shapes=[pltpu.SemaphoreType.DMA(())],
        cost_estimate=pl.CostEstimate(
            flops=0, transcendentals=0, bytes_accessed=2 * nbytes
        ),
    )(x4d)

    return y


if __name__ == "__main__":
    key = jax.random.PRNGKey(0)
    # Module's forward implies an input of shape [16, 49, 49] (float32).
    x394 = jax.random.normal(key, (16, 49, 49), dtype=jnp.float32)

    out = unsqueeze0(x394)
    out = jax.block_until_ready(out)

    # Sanity checks against the reference semantics of x394.unsqueeze(0).
    assert out.shape == (1, 16, 49, 49), out.shape
    assert out.dtype == x394.dtype
    assert bool(jnp.array_equal(out[0], x394))

    print("KERNEL_OK")
</pallas_src>

<mosaic_0001>
module attributes {stable_mosaic.version = 11 : i64} {
  func.func @_hbm_copy_kernel(%arg0: memref<1x16x49x49xf32, #tpu.memory_space<any>>, %arg1: memref<1x16x49x49xf32, #tpu.memory_space<any>>, %arg2: memref<!tpu.dma_semaphore, #tpu.memory_space<semaphore_mem>>) attributes {dimension_semantics = [], scalar_prefetch = 0 : i64, scratch_operands = 1 : i64, tpu.core_type = #tpu.core_type<tc>} {
    tpu.enqueue_dma source(%arg0 : memref<1x16x49x49xf32, #tpu.memory_space<any>>) target(%arg1 : memref<1x16x49x49xf32, #tpu.memory_space<any>>) target_semaphore(%arg2 : memref<!tpu.dma_semaphore, #tpu.memory_space<semaphore_mem>>)
    tpu.wait_dma2 semaphore(%arg2 : memref<!tpu.dma_semaphore, #tpu.memory_space<semaphore_mem>>) src(%arg0 : memref<1x16x49x49xf32, #tpu.memory_space<any>>) dst(%arg1 : memref<1x16x49x49xf32, #tpu.memory_space<any>>)
    return
  }
}

</mosaic_0001>

<llo_original>
// kernel: tpu_custom_call.1
$region0: #{tpu_custom_call.1}
  #allocation0 [shape = 'u32[]', space=smem, size = 0x4, offset = 0x4, fixed_abs, tag = 'smem constant byte address 0x4 - core index']
  #allocation1 [shape = 'u32[144,128]{1,0:T(1,128)}', space=vmem, size = 0x12000, scoped, tag = 'internal scratch']
  #allocation2 [shape = 's32[1]{0}', space=sflag, size = 0x4, scoped, tag = 'scratch operand']
  #allocation3 [shape = 's32[]', space=sflag, size = 0x4, offset = 0, fixed_abs, tag = 'sflag constant byte address 0x0 - dummy sync flag']
  %s0 = inlined_call_operand.vmem [shape: f32[1,16,49,49], index: 0, kind: input, shape index: {}]
  %s1 = inlined_call_operand.vmem [shape: f32[1,16,49,49], index: 1, kind: output, shape index: {}]
  %s2 = sld [smem:[#allocation0]]
  $region39: #{tpu_custom_call.1} parent=0
    _
  %s4 = ssub.s32 1, %s2
  %s5 = scalar_select 0, %s4, %s2
  %p7 = scmp.lt.u32.totalorder 49, 8
  %p8 = pneg %p7
  // Predicated region
  $region2: #{tpu_custom_call.1} parent=0 // pred_check
    _
  $region3: #{tpu_custom_call.1} parent=0 // pred_check_branch
    %10 = sbr.rel (%p7) target = $region5
  $region4: #{tpu_custom_call.1} parent=0 // pred_region
    %s56 = sand.u32 49, 7
    %p57 = scmp.eq.s32.totalorder %s56, 0
    %p58 = pneg %p57
    // Predicated region
    $region17: #{tpu_custom_call.1} parent=4 // pred_check
      _
    $region18: #{tpu_custom_call.1} parent=4 // pred_check_branch
      %60 = sbr.rel (%p57) target = $region20
    $region19: #{tpu_custom_call.1} parent=4 // pred_region
      %s61 = sand.u32 49, 7
      %s62 = ssub.s32 49, %s61
      %s63 = scalar_lea.vmem %s0, %s62
      %s64 = ssub.s32 49, %s61
      %s65 = scalar_lea.vmem %s1, %s64
      loop: start=0, step=1, limit=1
      $region21: #{tpu_custom_call.1} parent=19 // loop_pre_header
        _
      $region22: #{tpu_custom_call.1} parent=19 // loop_header
        %s67 = sphi 0, %s71
        %p68 = scmp.ge.s32.totalorder %s67, 1
        %s72 = sphi %s0, %s0
        %s73 = sphi %s1, %s1
      $region23: #{tpu_custom_call.1} parent=19 // loop_header_branch
        %70 = sbr.rel (%p68) target = $region27
      $region24: #{tpu_custom_call.1} parent=19 // loop_body
        %v74 = vld [vmem:[%s72] sm:$0xff]
        %75 = vst [vmem:[%s73] sm:$0xff] %v74
        %v76 = vld [vmem:[%s72 + $0x8] sm:$0xff]
        %77 = vst [vmem:[%s73 + $0x8] sm:$0xff] %v76
        %v78 = vld [vmem:[%s72 + $0x10] sm:$0xff]
        %79 = vst [vmem:[%s73 + $0x10] sm:$0xff] %v78
        %v80 = vld [vmem:[%s72 + $0x18] sm:$0xff]
        %81 = vst [vmem:[%s73 + $0x18] sm:$0xff] %v80
        %v82 = vld [vmem:[%s72 + $0x20] sm:$0xff]
        %83 = vst [vmem:[%s73 + $0x20] sm:$0xff] %v82
        %v84 = vld [vmem:[%s72 + $0x28] sm:$0xff]
        %85 = vst [vmem:[%s73 + $0x28] sm:$0xff] %v84
        %v86 = vld [vmem:[%s72 + $0x38] sm:$0xff]
        %87 = vst [vmem:[%s73 + $0x38] sm:$0xff] %v86
        %v88 = vld [vmem:[%s72 + $0x40] sm:$0xff]
        %89 = vst [vmem:[%s73 + $0x40] sm:$0xff] %v88
        %v90 = vld [vmem:[%s72 + $0x48] sm:$0xff]
        %91 = vst [vmem:[%s73 + $0x48] sm:$0xff] %v90
        %v92 = vld [vmem:[%s72 + $0x50] sm:$0xff]
        %93 = vst [vmem:[%s73 + $0x50] sm:$0xff] %v92
        %v94 = vld [vmem:[%s72 + $0x58] sm:$0xff]
        %95 = vst [vmem:[%s73 + $0x58] sm:$0xff] %v94
        %v96 = vld [vmem:[%s72 + $0x60] sm:$0xff]
        %97 = vst [vmem:[%s73 + $0x60] sm:$0xff] %v96
        %v98 = vld [vmem:[%s72 + $0x70] sm:$0xff]
        %99 = vst [vmem:[%s73 + $0x70] sm:$0xff] %v98
        %v100 = vld [vmem:[%s72 + $0x78] sm:$0xff]
        %101 = vst [vmem:[%s73 + $0x78] sm:$0xff] %v100
        %v102 = vld [vmem:[%s72 + $0x80] sm:$0xff]
        %103 = vst [vmem:[%s73 + $0x80] sm:$0xff] %v102
        %v104 = vld [vmem:[%s72 + $0x88] sm:$0xff]
        %105 = vst [vmem:[%s73 + $0x88] sm:$0xff] %v104
        %v106 = vld [vmem:[%s72 + $0x90] sm:$0xff]
        %107 = vst [vmem:[%s73 + $0x90] sm:$0xff] %v106
        %v108 = vld [vmem:[%s72 + $0x98] sm:$0xff]
        %109 = vst [vmem:[%s73 + $0x98] sm:$0xff] %v108
        %v110 = vld [vmem:[%s72 + $0xa8] sm:$0xff]
        %111 = vst [vmem:[%s73 + $0xa8] sm:$0xff] %v110
        %v112 = vld [vmem:[%s72 + $0xb0] sm:$0xff]
        %113 = vst [vmem:[%s73 + $0xb0] sm:$0xff] %v112
        %v114 = vld [vmem:[%s72 + $0xb8] sm:$0xff]
        %115 = vst [vmem:[%s73 + $0xb8] sm:$0xff] %v114
        %v116 = vld [vmem:[%s72 + $0xc0] sm:$0xff]
        %117 = vst [vmem:[%s73 + $0xc0] sm:$0xff] %v116
        %v118 = vld [vmem:[%s72 + $0xc8] sm:$0xff]
        %119 = vst [vmem:[%s73 + $0xc8] sm:$0xff] %v118
        %v120 = vld [vmem:[%s72 + $0xd0] sm:$0xff]
        %121 = vst [vmem:[%s73 + $0xd0] sm:$0xff] %v120
        %v122 = vld [vmem:[%s72 + $0xe0] sm:$0xff]
        %123 = vst [vmem:[%s73 + $0xe0] sm:$0xff] %v122
        %v124 = vld [vmem:[%s72 + $0xe8] sm:$0xff]
        %125 = vst [vmem:[%s73 + $0xe8] sm:$0xff] %v124
        %v126 = vld [vmem:[%s72 + $0xf0] sm:$0xff]
        %127 = vst [vmem:[%s73 + $0xf0] sm:$0xff] %v126
        %v128 = vld [vmem:[%s72 + $0xf8] sm:$0xff]
        %129 = vst [vmem:[%s73 + $0xf8] sm:$0xff] %v128
        %v130 = vld [vmem:[%s72 + $0x100] sm:$0xff]
        %131 = vst [vmem:[%s73 + $0x100] sm:$0xff] %v130
        %v132 = vld [vmem:[%s72 + $0x108] sm:$0xff]
        %133 = vst [vmem:[%s73 + $0x108] sm:$0xff] %v132
        %v134 = vld [vmem:[%s72 + $0x118] sm:$0xff]
        %135 = vst [vmem:[%s73 + $0x118] sm:$0xff] %v134
        %v136 = vld [vmem:[%s72 + $0x120] sm:$0xff]
        %137 = vst [vmem:[%s73 + $0x120] sm:$0xff] %v136
        %v138 = vld [vmem:[%s72 + $0x128] sm:$0xff]
        %139 = vst [vmem:[%s73 + $0x128] sm:$0xff] %v138
        %v140 = vld [vmem:[%s72 + $0x130] sm:$0xff]
        %141 = vst [vmem:[%s73 + $0x130] sm:$0xff] %v140
        %v142 = vld [vmem:[%s72 + $0x138] sm:$0xff]
        %143 = vst [vmem:[%s73 + $0x138] sm:$0xff] %v142
        %v144 = vld [vmem:[%s72 + $0x140] sm:$0xff]
        %145 = vst [vmem:[%s73 + $0x140] sm:$0xff] %v144
        %v146 = vld [vmem:[%s72 + $0x150] sm:$0xff]
        %147 = vst [vmem:[%s73 + $0x150] sm:$0xff] %v146
        %v148 = vld [vmem:[%s72 + $0x158] sm:$0xff]
        %149 = vst [vmem:[%s73 + $0x158] sm:$0xff] %v148
        %v150 = vld [vmem:[%s72 + $0x160] sm:$0xff]
        %151 = vst [vmem:[%s73 + $0x160] sm:$0xff] %v150
        %v152 = vld [vmem:[%s72 + $0x168] sm:$0xff]
        %153 = vst [vmem:[%s73 + $0x168] sm:$0xff] %v152
        %v154 = vld [vmem:[%s72 + $0x170] sm:$0xff]
        %155 = vst [vmem:[%s73 + $0x170] sm:$0xff] %v154
        %v156 = vld [vmem:[%s72 + $0x178] sm:$0xff]
        %157 = vst [vmem:[%s73 + $0x178] sm:$0xff] %v156
        %v158 = vld [vmem:[%s72 + $0x188] sm:$0xff]
        %159 = vst [vmem:[%s73 + $0x188] sm:$0xff] %v158
        %v160 = vld [vmem:[%s72 + $0x190] sm:$0xff]
        %161 = vst [vmem:[%s73 + $0x190] sm:$0xff] %v160
        %v162 = vld [vmem:[%s72 + $0x198] sm:$0xff]
        %163 = vst [vmem:[%s73 + $0x198] sm:$0xff] %v162
        %v164 = vld [vmem:[%s72 + $0x1a0] sm:$0xff]
        %165 = vst [vmem:[%s73 + $0x1a0] sm:$0xff] %v164
        %v166 = vld [vmem:[%s72 + $0x1a8] sm:$0xff]
        %167 = vst [vmem:[%s73 + $0x1a8] sm:$0xff] %v166
        %v168 = vld [vmem:[%s72 + $0x1b0] sm:$0xff]
        %169 = vst [vmem:[%s73 + $0x1b0] sm:$0xff] %v168
        %v170 = vld [vmem:[%s72 + $0x1c0] sm:$0xff]
        %171 = vst [vmem:[%s73 + $0x1c0] sm:$0xff] %v170
        %v172 = vld [vmem:[%s72 + $0x1c8] sm:$0xff]
        %173 = vst [vmem:[%s73 + $0x1c8] sm:$0xff] %v172
        %v174 = vld [vmem:[%s72 + $0x1d0] sm:$0xff]
        %175 = vst [vmem:[%s73 + $0x1d0] sm:$0xff] %v174
        %v176 = vld [vmem:[%s72 + $0x1d8] sm:$0xff]
        %177 = vst [vmem:[%s73 + $0x1d8] sm:$0xff] %v176
        %v178 = vld [vmem:[%s72 + $0x1e0] sm:$0xff]
        %179 = vst [vmem:[%s73 + $0x1e0] sm:$0xff] %v178
        %v180 = vld [vmem:[%s72 + $0x1e8] sm:$0xff]
        %181 = vst [vmem:[%s73 + $0x1e8] sm:$0xff] %v180
        %v182 = vld [vmem:[%s72 + $0x1f8] sm:$0xff]
        %183 = vst [vmem:[%s73 + $0x1f8] sm:$0xff] %v182
        %v184 = vld [vmem:[%s72 + $0x200] sm:$0xff]
        %185 = vst [vmem:[%s73 + $0x200] sm:$0xff] %v184
        %v186 = vld [vmem:[%s72 + $0x208] sm:$0xff]
        %187 = vst [vmem:[%s73 + $0x208] sm:$0xff] %v186
        %v188 = vld [vmem:[%s72 + $0x210] sm:$0xff]
        %189 = vst [vmem:[%s73 + $0x210] sm:$0xff] %v188
        %v190 = vld [vmem:[%s72 + $0x218] sm:$0xff]
        %191 = vst [vmem:[%s73 + $0x218] sm:$0xff] %v190
        %v192 = vld [vmem:[%s72 + $0x220] sm:$0xff]
        %193 = vst [vmem:[%s73 + $0x220] sm:$0xff] %v192
        %v194 = vld [vmem:[%s72 + $0x230] sm:$0xff]
        %195 = vst [vmem:[%s73 + $0x230] sm:$0xff] %v194
        %v196 = vld [vmem:[%s72 + $0x238] sm:$0xff]
        %197 = vst [vmem:[%s73 + $0x238] sm:$0xff] %v196
        %v198 = vld [vmem:[%s72 + $0x240] sm:$0xff]
        %199 = vst [vmem:[%s73 + $0x240] sm:$0xff] %v198
        %v200 = vld [vmem:[%s72 + $0x248] sm:$0xff]
        %201 = vst [vmem:[%s73 + $0x248] sm:$0xff] %v200
        %v202 = vld [vmem:[%s72 + $0x250] sm:$0xff]
        %203 = vst [vmem:[%s73 + $0x250] sm:$0xff] %v202
        %v204 = vld [vmem:[%s72 + $0x258] sm:$0xff]
        %205 = vst [vmem:[%s73 + $0x258] sm:$0xff] %v204
        %v206 = vld [vmem:[%s72 + $0x268] sm:$0xff]
        %207 = vst [vmem:[%s73 + $0x268] sm:$0xff] %v206
        %v208 = vld [vmem:[%s72 + $0x270] sm:$0xff]
        %209 = vst [vmem:[%s73 + $0x270] sm:$0xff] %v208
        %v210 = vld [vmem:[%s72 + $0x278] sm:$0xff]
        %211 = vst [vmem:[%s73 + $0x278] sm:$0xff] %v210
        %v212 = vld [vmem:[%s72 + $0x280] sm:$0xff]
        %213 = vst [vmem:[%s73 + $0x280] sm:$0xff] %v212
        %v214 = vld [vmem:[%s72 + $0x288] sm:$0xff]
        %215 = vst [vmem:[%s73 + $0x288] sm:$0xff] %v214
        %v216 = vld [vmem:[%s72 + $0x290] sm:$0xff]
        %217 = vst [vmem:[%s73 + $0x290] sm:$0xff] %v216
        %v218 = vld [vmem:[%s72 + $0x2a0] sm:$0xff]
        %219 = vst [vmem:[%s73 + $0x2a0] sm:$0xff] %v218
        %v220 = vld [vmem:[%s72 + $0x2a8] sm:$0xff]
        %221 = vst [vmem:[%s73 + $0x2a8] sm:$0xff] %v220
        %v222 = vld [vmem:[%s72 + $0x2b0] sm:$0xff]
        %223 = vst [vmem:[%s73 + $0x2b0] sm:$0xff] %v222
        %v224 = vld [vmem:[%s72 + $0x2b8] sm:$0xff]
        %225 = vst [vmem:[%s73 + $0x2b8] sm:$0xff] %v224
        %v226 = vld [vmem:[%s72 + $0x2c0] sm:$0xff]
        %227 = vst [vmem:[%s73 + $0x2c0] sm:$0xff] %v226
        %v228 = vld [vmem:[%s72 + $0x2c8] sm:$0xff]
        %229 = vst [vmem:[%s73 + $0x2c8] sm:$0xff] %v228
        %v230 = vld [vmem:[%s72 + $0x2d8] sm:$0xff]
        %231 = vst [vmem:[%s73 + $0x2d8] sm:$0xff] %v230
        %v232 = vld [vmem:[%s72 + $0x2e0] sm:$0xff]
        %233 = vst [vmem:[%s73 + $0x2e0] sm:$0xff] %v232
        %v234 = vld [vmem:[%s72 + $0x2e8] sm:$0xff]
        %235 = vst [vmem:[%s73 + $0x2e8] sm:$0xff] %v234
        %v236 = vld [vmem:[%s72 + $0x2f0] sm:$0xff]
        %237 = vst [vmem:[%s73 + $0x2f0] sm:$0xff] %v236
        %v238 = vld [vmem:[%s72 + $0x2f8] sm:$0xff]
        %239 = vst [vmem:[%s73 + $0x2f8] sm:$0xff] %v238
        %v240 = vld [vmem:[%s72 + $0x300] sm:$0xff]
        %241 = vst [vmem:[%s73 + $0x300] sm:$0xff] %v240
        %v242 = vld [vmem:[%s72 + $0x310] sm:$0xff]
        %243 = vst [vmem:[%s73 + $0x310] sm:$0xff] %v242
        %v244 = vld [vmem:[%s72 + $0x318] sm:$0xff]
        %245 = vst [vmem:[%s73 + $0x318] sm:$0xff] %v244
        %v246 = vld [vmem:[%s72 + $0x320] sm:$0xff]
        %247 = vst [vmem:[%s73 + $0x320] sm:$0xff] %v246
        %v248 = vld [vmem:[%s72 + $0x328] sm:$0xff]
        %249 = vst [vmem:[%s73 + $0x328] sm:$0xff] %v248
        %v250 = vld [vmem:[%s72 + $0x330] sm:$0xff]
        %251 = vst [vmem:[%s73 + $0x330] sm:$0xff] %v250
        %v252 = vld [vmem:[%s72 + $0x338] sm:$0xff]
        %253 = vst [vmem:[%s73 + $0x338] sm:$0xff] %v252
        %v254 = vld [vmem:[%s72 + $0x348] sm:$0xff]
        %255 = vst [vmem:[%s73 + $0x348] sm:$0xff] %v254
        %v256 = vld [vmem:[%s72 + $0x350] sm:$0xff]
        %257 = vst [vmem:[%s73 + $0x350] sm:$0xff] %v256
        %v258 = vld [vmem:[%s72 + $0x358] sm:$0xff]
        %259 = vst [vmem:[%s73 + $0x358] sm:$0xff] %v258
        %v260 = vld [vmem:[%s72 + $0x360] sm:$0xff]
        %261 = vst [vmem:[%s73 + $0x360] sm:$0xff] %v260
        %v262 = vld [vmem:[%s72 + $0x368] sm:$0xff]
        %263 = vst [vmem:[%s73 + $0x368] sm:$0xff] %v262
        %v264 = vld [vmem:[%s72 + $0x370] sm:$0xff]
        %265 = vst [vmem:[%s73 + $0x370] sm:$0xff] %v264
      $region25: #{tpu_custom_call.1} parent=19 // loop_footer
        %s71 = sadd.s32 1, %s67
      $region26: #{tpu_custom_call.1} parent=19 // loop_footer_branch
        %66 = sbr.rel target = $region22
      $region27: #{tpu_custom_call.1} parent=19 // loop_exit
        _
      %s266 = sshll.u32 1, %s61
      %s267 = ssub.s32 %s266, 1
      loop: start=0, step=1, limit=1
      $region28: #{tpu_custom_call.1} parent=19 // loop_pre_header
        _
      $region29: #{tpu_custom_call.1} parent=19 // loop_header
        %s269 = sphi 0, %s273
        %p270 = scmp.ge.s32.totalorder %s269, 1
        %s274 = sphi %s63, %s63
        %s275 = sphi %s65, %s65
      $region30: #{tpu_custom_call.1} parent=19 // loop_header_branch
        %272 = sbr.rel (%p270) target = $region34
      $region31: #{tpu_custom_call.1} parent=19 // loop_body
        %v276 = vld [vmem:[%s274] sm:%s267]
        %277 = vst [vmem:[%s275] sm:%s267] %v276
        %v278 = vld [vmem:[%s274 + $0x38] sm:%s267]
        %279 = vst [vmem:[%s275 + $0x38] sm:%s267] %v278
        %v280 = vld [vmem:[%s274 + $0x70] sm:%s267]
        %281 = vst [vmem:[%s275 + $0x70] sm:%s267] %v280
        %v282 = vld [vmem:[%s274 + $0xa8] sm:%s267]
        %283 = vst [vmem:[%s275 + $0xa8] sm:%s267] %v282
        %v284 = vld [vmem:[%s274 + $0xe0] sm:%s267]
        %285 = vst [vmem:[%s275 + $0xe0] sm:%s267] %v284
        %v286 = vld [vmem:[%s274 + $0x118] sm:%s267]
        %287 = vst [vmem:[%s275 + $0x118] sm:%s267] %v286
        %v288 = vld [vmem:[%s274 + $0x150] sm:%s267]
        %289 = vst [vmem:[%s275 + $0x150] sm:%s267] %v288
        %v290 = vld [vmem:[%s274 + $0x188] sm:%s267]
        %291 = vst [vmem:[%s275 + $0x188] sm:%s267] %v290
        %v292 = vld [vmem:[%s274 + $0x1c0] sm:%s267]
        %293 = vst [vmem:[%s275 + $0x1c0] sm:%s267] %v292
        %v294 = vld [vmem:[%s274 + $0x1f8] sm:%s267]
        %295 = vst [vmem:[%s275 + $0x1f8] sm:%s267] %v294
        %v296 = vld [vmem:[%s274 + $0x230] sm:%s267]
        %297 = vst [vmem:[%s275 + $0x230] sm:%s267] %v296
        %v298 = vld [vmem:[%s274 + $0x268] sm:%s267]
        %299 = vst [vmem:[%s275 + $0x268] sm:%s267] %v298
        %v300 = vld [vmem:[%s274 + $0x2a0] sm:%s267]
        %301 = vst [vmem:[%s275 + $0x2a0] sm:%s267] %v300
        %v302 = vld [vmem:[%s274 + $0x2d8] sm:%s267]
        %303 = vst [vmem:[%s275 + $0x2d8] sm:%s267] %v302
        %v304 = vld [vmem:[%s274 + $0x310] sm:%s267]
        %305 = vst [vmem:[%s275 + $0x310] sm:%s267] %v304
        %v306 = vld [vmem:[%s274 + $0x348] sm:%s267]
        %307 = vst [vmem:[%s275 + $0x348] sm:%s267] %v306
      $region32: #{tpu_custom_call.1} parent=19 // loop_footer
        %s273 = sadd.s32 1, %s269
      $region33: #{tpu_custom_call.1} parent=19 // loop_footer_branch
        %268 = sbr.rel target = $region29
      $region34: #{tpu_custom_call.1} parent=19 // loop_exit
        _
    $region20: #{tpu_custom_call.1} parent=4 // pred_fallthru
      _
  $region5: #{tpu_custom_call.1} parent=0 // pred_fallthru
    _
  // Predicated region
  $region6: #{tpu_custom_call.1} parent=0 // pred_check
    %p11 = pneg %p7
  $region7: #{tpu_custom_call.1} parent=0 // pred_check_branch
    %13 = sbr.rel (%p11) target = $region9
  $region8: #{tpu_custom_call.1} parent=0 // pred_region
    %s14 = sshll.u32 1, 49
    %s15 = ssub.s32 %s14, 1
    loop: start=0, step=1, limit=1
    $region10: #{tpu_custom_call.1} parent=8 // loop_pre_header
      _
    $region11: #{tpu_custom_call.1} parent=8 // loop_header
      %s17 = sphi 0, %s21
      %p18 = scmp.ge.s32.totalorder %s17, 1
      %s22 = sphi %s0, %s0
      %s23 = sphi %s1, %s1
    $region12: #{tpu_custom_call.1} parent=8 // loop_header_branch
      %20 = sbr.rel (%p18) target = $region16
    $region13: #{tpu_custom_call.1} parent=8 // loop_body
      %v24 = vld [vmem:[%s22] sm:%s15]
      %25 = vst [vmem:[%s23] sm:%s15] %v24
      %v26 = vld [vmem:[%s22 + $0x38] sm:%s15]
      %27 = vst [vmem:[%s23 + $0x38] sm:%s15] %v26
      %v28 = vld [vmem:[%s22 + $0x70] sm:%s15]
      %29 = vst [vmem:[%s23 + $0x70] sm:%s15] %v28
      %v30 = vld [vmem:[%s22 + $0xa8] sm:%s15]
      %31 = vst [vmem:[%s23 + $0xa8] sm:%s15] %v30
      %v32 = vld [vmem:[%s22 + $0xe0] sm:%s15]
      %33 = vst [vmem:[%s23 + $0xe0] sm:%s15] %v32
      %v34 = vld [vmem:[%s22 + $0x118] sm:%s15]
      %35 = vst [vmem:[%s23 + $0x118] sm:%s15] %v34
      %v36 = vld [vmem:[%s22 + $0x150] sm:%s15]
      %37 = vst [vmem:[%s23 + $0x150] sm:%s15] %v36
      %v38 = vld [vmem:[%s22 + $0x188] sm:%s15]
      %39 = vst [vmem:[%s23 + $0x188] sm:%s15] %v38
      %v40 = vld [vmem:[%s22 + $0x1c0] sm:%s15]
      %41 = vst [vmem:[%s23 + $0x1c0] sm:%s15] %v40
      %v42 = vld [vmem:[%s22 + $0x1f8] sm:%s15]
      %43 = vst [vmem:[%s23 + $0x1f8] sm:%s15] %v42
      %v44 = vld [vmem:[%s22 + $0x230] sm:%s15]
      %45 = vst [vmem:[%s23 + $0x230] sm:%s15] %v44
      %v46 = vld [vmem:[%s22 + $0x268] sm:%s15]
      %47 = vst [vmem:[%s23 + $0x268] sm:%s15] %v46
      %v48 = vld [vmem:[%s22 + $0x2a0] sm:%s15]
      %49 = vst [vmem:[%s23 + $0x2a0] sm:%s15] %v48
      %v50 = vld [vmem:[%s22 + $0x2d8] sm:%s15]
      %51 = vst [vmem:[%s23 + $0x2d8] sm:%s15] %v50
      %v52 = vld [vmem:[%s22 + $0x310] sm:%s15]
      %53 = vst [vmem:[%s23 + $0x310] sm:%s15] %v52
      %v54 = vld [vmem:[%s22 + $0x348] sm:%s15]
      %55 = vst [vmem:[%s23 + $0x348] sm:%s15] %v54
    $region14: #{tpu_custom_call.1} parent=8 // loop_footer
      %s21 = sadd.s32 1, %s17
    $region15: #{tpu_custom_call.1} parent=8 // loop_footer_branch
      %16 = sbr.rel target = $region11
    $region16: #{tpu_custom_call.1} parent=8 // loop_exit
      _
  $region9: #{tpu_custom_call.1} parent=0 // pred_fallthru
    _
  // Predicated region
  $region35: #{tpu_custom_call.1} parent=0 // pred_check
    _
  $region36: #{tpu_custom_call.1} parent=0 // pred_check_branch
    %310 = sbr.rel (0) target = $region38
  $region37: #{tpu_custom_call.1} parent=0 // pred_region
    %311 = vsyncadd [#allocation2], 12544
  $region38: #{tpu_custom_call.1} parent=0 // pred_fallthru
    _
  %s312 = smul.u32 1, 16
  %s313 = smul.u32 %s312, 49
  %s314 = smul.u32 %s313, 1
  %s315 = sshll.u32 %s314, 4
  %316 = dma.done [#allocation2], %s315
  %317 = vsyncmov [#allocation2]
  %s318 = vpop.sfrf %317
  %p319 = scmp.eq.s32.totalorder %s318, 0
  %p320 = pneg %p319
  %322 = shalt.err (%p320)

</llo_original>
